<compile_context>
chip_gen: v6e
topology: v6e:2x2x1
jax: 0.10.0
libtpu: 0.0.40
codegen_flags: <defaults>
</compile_context>

<pallas_src>
import functools

import jax
import jax.numpy as jnp
from jax.experimental import pallas as pl
from jax.experimental.pallas import tpu as pltpu

LANES = 128            # vreg lane width
MAX_BLOCK_ROWS = 4096  # (4096, 128) f32 = 2 MiB per input per buffer -> ~8 MiB pipeline


def _int_pow(x, gamma):
    """x ** gamma, guaranteed to stay an integer power (VPU multiplies, no EUP)."""
    if gamma == 2:
        return x * x
    return x ** gamma


def _focal_elementwise(target, predict, *, gamma, alpha):
    """Per-element BCE focal loss, exactly as in the PyTorch module."""
    log_p = jnp.log(predict + 1e-5)
    log_1mp = jnp.log(1.0 - predict + 1e-5)
    pos = (1.0 - alpha) * _int_pow(1.0 - predict + 1e-5, gamma) * (target * log_p)
    neg = alpha * _int_pow(predict + 1e-5, gamma) * ((1.0 - target) * log_1mp)
    return -(pos + neg)


def _bce_focal_kernel(p_ref, t_ref, out_ref, acc_ref, *,
                      n_valid, gamma, alpha, block_rows, needs_mask, reduction):
    i = pl.program_id(0)
    last = pl.num_programs(0) - 1

    @pl.when(i == 0)
    def _():
        acc_ref[...] = jnp.zeros_like(acc_ref)

    p = p_ref[...].astype(jnp.float32)
    t = t_ref[...].astype(jnp.float32)

    if needs_mask:
        # Only the final grid step can contain padded / out-of-bounds elements;
        # every other step runs the plain unmasked path (pure DMA + VPU/EUP).
        @pl.when(i < last)
        def _():
            loss = _focal_elementwise(t, p, gamma=gamma, alpha=alpha)
            acc_ref[...] += jnp.sum(loss, axis=0, keepdims=True)

        @pl.when(i == last)
        def _():
            # Invariant we rely on: Pallas leaves the out-of-bounds portion of a
            # ragged last block at its natural (un-rebased) offset with
            # unspecified contents; the iota mask below indexes accordingly and
            # we sanitise BEFORE the logs so garbage can never produce NaN/Inf.
            row = jax.lax.broadcasted_iota(jnp.int32, p.shape, 0) + i * block_rows
            col = jax.lax.broadcasted_iota(jnp.int32, p.shape, 1)
            valid = row * LANES + col < n_valid
            p_s = jnp.where(valid, p, 0.0)
            t_s = jnp.where(valid, t, 0.0)
            loss = _focal_elementwise(t_s, p_s, gamma=gamma, alpha=alpha)
            loss = jnp.where(valid, loss, 0.0)
            acc_ref[...] += jnp.sum(loss, axis=0, keepdims=True)
    else:
        loss = _focal_elementwise(t, p, gamma=gamma, alpha=alpha)
        acc_ref[...] += jnp.sum(loss, axis=0, keepdims=True)

    @pl.when(i == last)
    def _():
        total = jnp.sum(acc_ref[...])            # single cross-lane reduce, epilogue only
        if reduction == "mean":
            total = total / jnp.float32(n_valid)
        out_ref[0, 0] = total


def bce_focal_loss(predict, target, gamma=2, alpha=0.25, reduction="mean"):
    """Scalar BCE focal loss over arbitrarily-shaped (e.g. NCHW) inputs."""
    if reduction not in ("mean", "sum"):
        # TODO(synk): reduction='none' (elementwise output) would need a map kernel.
        raise NotImplementedError("only 'mean' and 'sum' reductions are supported")
    assert predict.shape == target.shape

    # Keep `** gamma` an integer power (VPU mul) even if the caller passed 2.0.
    if isinstance(gamma, float) and float(gamma).is_integer():
        gamma = int(gamma)

    n = int(predict.size)
    p = predict.reshape(-1)
    t = target.reshape(-1)

    rows = (n + LANES - 1) // LANES
    pad = rows * LANES - n
    if pad:
        # TODO(synk): this is an O(N) HBM copy for sub-lane-unaligned inputs;
        # lane-aligned inputs (the common case) take the zero-copy reshape path.
        p = jnp.concatenate([p, jnp.zeros((pad,), p.dtype)])
        t = jnp.concatenate([t, jnp.zeros((pad,), t.dtype)])
    p = p.reshape(rows, LANES)
    t = t.reshape(rows, LANES)

    # Biggest block that fits comfortably: full array if small, else 4096 rows
    # (multiple of 8/16/32 so every dtype's sublane packing is satisfied).
    block_rows = rows if rows <= MAX_BLOCK_ROWS else MAX_BLOCK_ROWS
    grid = (rows + block_rows - 1) // block_rows
    needs_mask = (grid * block_rows * LANES) != n

    kernel = functools.partial(
        _bce_focal_kernel,
        n_valid=n, gamma=gamma, alpha=alpha,
        block_rows=block_rows, needs_mask=needs_mask, reduction=reduction)

    out = pl.pallas_call(
        kernel,
        out_shape=jax.ShapeDtypeStruct((1, 1), jnp.float32),
        grid_spec=pltpu.PrefetchScalarGridSpec(
            num_scalar_prefetch=0,
            grid=(grid,),
            in_specs=[
                pl.BlockSpec((block_rows, LANES), lambda i: (i, 0)),
                pl.BlockSpec((block_rows, LANES), lambda i: (i, 0)),
            ],
            out_specs=pl.BlockSpec(memory_space=pltpu.SMEM),
            scratch_shapes=[pltpu.VMEM((1, LANES), jnp.float32)],
        ),
        compiler_params=pltpu.CompilerParams(
            dimension_semantics=("arbitrary",),
            vmem_limit_bytes=32 * 1024 * 1024),
    )(p, t)
    return out[0, 0]


def _reference_loss(predict, target, gamma=2, alpha=0.25, reduction="mean"):
    pt = predict
    loss = -((1 - alpha) * (1 - pt + 1e-5) ** gamma * (target * jnp.log(pt + 1e-5))
             + alpha * (pt + 1e-5) ** gamma * ((1 - target) * jnp.log(1 - pt + 1e-5)))
    if reduction == "mean":
        return jnp.mean(loss)
    return jnp.sum(loss)


if __name__ == "__main__":
    key = jax.random.PRNGKey(0)

    shapes = [
        (2, 4, 16, 16),   # NCHW demo shape; exact (rows, 128) fit -> single block, no mask
        (3, 5, 17, 19),   # odd size -> sub-lane zero pad + masked last (only) block
        (4, 8, 96, 90),   # 2160 rows -> multi-step grid (block=4096 capped to rows? no: single
                          # block since 2160 <= 4096) -- still exercises a larger tile
        (4, 8, 192, 90),  # 4320 rows -> multi-step grid + row-ragged (OOB) last block
    ]
    for shape in shapes:
        key, k1, k2 = jax.random.split(key, 3)
        target = (jax.random.uniform(k1, shape) > 0.5).astype(jnp.float32)
        # BCE focal loss expects probabilities in (0, 1)
        predict = jax.nn.sigmoid(jax.random.normal(k2, shape)).astype(jnp.float32)

        loss = jax.block_until_ready(bce_focal_loss(predict, target))
        ref = _reference_loss(predict, target)
        assert jnp.allclose(loss, ref, rtol=1e-4, atol=1e-6), (shape, loss, ref)

        loss_sum = jax.block_until_ready(
            bce_focal_loss(predict, target, reduction="sum"))
        ref_sum = _reference_loss(predict, target, reduction="sum")
        assert jnp.allclose(loss_sum, ref_sum, rtol=1e-4, atol=1e-4), (shape, loss_sum, ref_sum)

    # Mixed-dtype caller contract: bf16 targets (0/1 exactly representable) halve
    # that input's HBM bytes; upcast happens in-register inside the kernel.
    key, k1, k2 = jax.random.split(key, 3)
    shape = (2, 4, 16, 16)
    target_bf16 = (jax.random.uniform(k1, shape) > 0.5).astype(jnp.bfloat16)
    predict = jax.nn.sigmoid(jax.random.normal(k2, shape)).astype(jnp.float32)
    loss = jax.block_until_ready(bce_focal_loss(predict, target_bf16))
    ref = _reference_loss(predict, target_bf16.astype(jnp.float32))
    assert jnp.allclose(loss, ref, rtol=1e-4, atol=1e-6), (loss, ref)

    print("KERNEL_OK")
</pallas_src>

<mosaic_0001>
module attributes {stable_mosaic.version = 11 : i64} {
  func.func @_bce_focal_kernel(%arg0: i32, %arg1: memref<16x128xf32, #tpu.memory_space<vmem>>, %arg2: memref<16x128xf32, #tpu.memory_space<vmem>>, %arg3: memref<1x1xf32, #tpu.memory_space<smem>>, %arg4: memref<1x128xf32, #tpu.memory_space<vmem>>) attributes {dimension_semantics = [#tpu.dimension_semantics<arbitrary>], iteration_bounds = array<i64: 1>, scalar_prefetch = 0 : i64, scratch_operands = 1 : i64, tpu.core_type = #tpu.core_type<tc>, window_params = [{transform_indices = @transform_0, window_bounds = array<i64: 16, 128>}, {transform_indices = @transform_1, window_bounds = array<i64: 16, 128>}, {transform_indices = @transform_2, window_bounds = array<i64: 1, 1>}]} {
    %c0_i32 = arith.constant 0 : i32
    %0 = arith.cmpi eq, %arg0, %c0_i32 : i32
    %1 = arith.extui %0 : i1 to i32
    %c0_i32_0 = arith.constant 0 : i32
    %2 = arith.cmpi ne, %1, %c0_i32_0 : i32
    scf.if %2 {
      %cst_20 = arith.constant 0.000000e+00 : f32
      %42 = vector.broadcast %cst_20 : f32 to vector<1x128xf32>
      %c0_21 = arith.constant 0 : index
      %c0_22 = arith.constant 0 : index
      %43 = vector.load %arg4[%c0_21, %c0_22] : memref<1x128xf32, #tpu.memory_space<vmem>>, vector<1x128xf32>
      tpu.vector_store %arg4[%c0_21, %c0_22], %42 {strides = array<i32>} : memref<1x128xf32, #tpu.memory_space<vmem>>, vector<1x128xf32>,
    } else {
    }
    %c0 = arith.constant 0 : index
    %c0_1 = arith.constant 0 : index
    %3 = vector.load %arg1[%c0, %c0_1] : memref<16x128xf32, #tpu.memory_space<vmem>>, vector<16x128xf32>
    %c0_2 = arith.constant 0 : index
    %c0_3 = arith.constant 0 : index
    %4 = vector.load %arg2[%c0_2, %c0_3] : memref<16x128xf32, #tpu.memory_space<vmem>>, vector<16x128xf32>
    %cst = arith.constant 9.99999974E-6 : f32
    %5 = vector.broadcast %cst : f32 to vector<16x128xf32>
    %6 = arith.addf %3, %5 : vector<16x128xf32>
    %7 = math.log %6 : vector<16x128xf32>
    %cst_4 = arith.constant 1.000000e+00 : f32
    %8 = vector.broadcast %cst_4 : f32 to vector<16x128xf32>
    %9 = arith.subf %8, %3 : vector<16x128xf32>
    %cst_5 = arith.constant 9.99999974E-6 : f32
    %10 = vector.broadcast %cst_5 : f32 to vector<16x128xf32>
    %11 = arith.addf %9, %10 : vector<16x128xf32>
    %12 = math.log %11 : vector<16x128xf32>
    %cst_6 = arith.constant 1.000000e+00 : f32
    %13 = vector.broadcast %cst_6 : f32 to vector<16x128xf32>
    %14 = arith.subf %13, %3 : vector<16x128xf32>
    %cst_7 = arith.constant 9.99999974E-6 : f32
    %15 = vector.broadcast %cst_7 : f32 to vector<16x128xf32>
    %16 = arith.addf %14, %15 : vector<16x128xf32>
    %17 = arith.mulf %16, %16 : vector<16x128xf32>
    %cst_8 = arith.constant 7.500000e-01 : f32
    %18 = vector.broadcast %cst_8 : f32 to vector<16x128xf32>
    %19 = arith.mulf %18, %17 : vector<16x128xf32>
    %20 = arith.mulf %4, %7 : vector<16x128xf32>
    %21 = arith.mulf %19, %20 : vector<16x128xf32>
    %cst_9 = arith.constant 9.99999974E-6 : f32
    %22 = vector.broadcast %cst_9 : f32 to vector<16x128xf32>
    %23 = arith.addf %3, %22 : vector<16x128xf32>
    %24 = arith.mulf %23, %23 : vector<16x128xf32>
    %cst_10 = arith.constant 2.500000e-01 : f32
    %25 = vector.broadcast %cst_10 : f32 to vector<16x128xf32>
    %26 = arith.mulf %25, %24 : vector<16x128xf32>
    %cst_11 = arith.constant 1.000000e+00 : f32
    %27 = vector.broadcast %cst_11 : f32 to vector<16x128xf32>
    %28 = arith.subf %27, %4 : vector<16x128xf32>
    %29 = arith.mulf %28, %12 : vector<16x128xf32>
    %30 = arith.mulf %26, %29 : vector<16x128xf32>
    %31 = arith.addf %21, %30 : vector<16x128xf32>
    %cst_12 = arith.constant 0.000000e+00 : f32
    %32 = vector.broadcast %cst_12 : f32 to vector<16x128xf32>
    %33 = arith.subf %32, %31 : vector<16x128xf32>
    %c0_13 = arith.constant 0 : index
    %c0_14 = arith.constant 0 : index
    %34 = vector.load %arg4[%c0_13, %c0_14] : memref<1x128xf32, #tpu.memory_space<vmem>>, vector<1x128xf32>
    %cst_15 = arith.constant dense<0.000000e+00> : vector<128xf32>
    %35 = vector.multi_reduction <add>, %33, %cst_15 [0] : vector<16x128xf32> to vector<128xf32>
    %36 = vector.shape_cast %35 : vector<128xf32> to vector<1x128xf32>
    %37 = arith.addf %34, %36 : vector<1x128xf32>
    %c0_16 = arith.constant 0 : index
    %c0_17 = arith.constant 0 : index
    %38 = vector.load %arg4[%c0_16, %c0_17] : memref<1x128xf32, #tpu.memory_space<vmem>>, vector<1x128xf32>
    tpu.vector_store %arg4[%c0_16, %c0_17], %37 {strides = array<i32>} : memref<1x128xf32, #tpu.memory_space<vmem>>, vector<1x128xf32>,
    %c0_i32_18 = arith.constant 0 : i32
    %39 = arith.cmpi eq, %arg0, %c0_i32_18 : i32
    %40 = arith.extui %39 : i1 to i32
    %c0_i32_19 = arith.constant 0 : i32
    %41 = arith.cmpi ne, %40, %c0_i32_19 : i32
    scf.if %41 {
      %c0_20 = arith.constant 0 : index
      %c0_21 = arith.constant 0 : index
      %42 = vector.load %arg4[%c0_20, %c0_21] : memref<1x128xf32, #tpu.memory_space<vmem>>, vector<1x128xf32>
      %43 = vector.shape_cast %42 : vector<1x128xf32> to vector<1x1x128xf32>
      %cst_22 = arith.constant dense<0.000000e+00> : vector<1xf32>
      %44 = vector.multi_reduction <add>, %43, %cst_22 [1, 2] : vector<1x1x128xf32> to vector<1xf32>
      %45 = vector.shape_cast %44 : vector<1xf32> to vector<1x1x1xf32>
      %46 = vector.extract %45[0, 0, 0] : f32 from vector<1x1x1xf32>
      %cst_23 = arith.constant 2.048000e+03 : f32
      %47 = arith.divf %46, %cst_23 : f32
      %c0_24 = arith.constant 0 : index
      %c0_25 = arith.constant 0 : index
      %48 = memref.load %arg3[%c0_24, %c0_25] : memref<1x1xf32, #tpu.memory_space<smem>>
      memref.store %47, %arg3[%c0_24, %c0_25] : memref<1x1xf32, #tpu.memory_space<smem>>
    } else {
    }
    return
  }
  func.func @transform_0(%arg0: i32) -> (i32, i32) {
    %c0_i32 = arith.constant 0 : i32
    %c0_i32_0 = arith.constant 0 : i32
    return %arg0, %c0_i32 : i32, i32
  }
  func.func @transform_1(%arg0: i32) -> (i32, i32) {
    %c0_i32 = arith.constant 0 : i32
    %c0_i32_0 = arith.constant 0 : i32
    return %arg0, %c0_i32 : i32, i32
  }
  func.func @transform_2(%arg0: i32) -> (i32, i32) {
    %c0_i32 = arith.constant 0 : i32
    %c0_i32_0 = arith.constant 0 : i32
    %c0_i32_1 = arith.constant 0 : i32
    return %c0_i32, %c0_i32_0 : i32, i32
  }
}

</mosaic_0001>

<llo_original>
// kernel: tpu_custom_call.1
$region0: #{tpu_custom_call.1}
  #allocation0 [shape = 'u32[]', space=smem, size = 0x4, offset = 0x4, fixed_abs, tag = 'smem constant byte address 0x4 - core index']
  #allocation1 [shape = 'u32[144,128]{1,0:T(1,128)}', space=vmem, size = 0x12000, scoped, tag = 'internal scratch']
  #allocation2 [shape = 'f32[1,128]{1,0:T(1,128)}', space=vmem, size = 0x200, scoped, tag = 'scratch operand']
  %s0 = inlined_call_operand.hbm [shape: f32[16,128], index: 0, kind: input, shape index: {}]
  %s1 = inlined_call_operand.hbm [shape: f32[16,128], index: 1, kind: input, shape index: {}]
  %s2 = inlined_call_operand.hbm [shape: f32[1,1], index: 2, kind: output, shape index: {}]
  %s3 = sld [smem:[#allocation0]]
  $region34: #{tpu_custom_call.1} parent=0
    _
  %s5 = ssub.s32 1, %s3
  %s6 = scalar_select 0, %s5, %s3
  $region1: #{tpu_custom_call.1} parent=0
    #allocation3 [shape = 'u8[8192]{0}', space=vmem, size = 0x2000, scoped, tag = 'input window, operand 0, single buffered']
    #allocation4 [shape = 's32[1]{0}', space=sflag, size = 0x4, scoped, tag = 'scoped memory for tpu_custom_call.1']
    #allocation5 [shape = 's32[1]{0}', space=sflag, size = 0x4, scoped, tag = 'scoped memory for tpu_custom_call.1']
    #allocation6 [shape = 'u8[8192]{0}', space=vmem, size = 0x2000, scoped, tag = 'input window, operand 1, single buffered']
    #allocation7 [shape = 's32[1]{0}', space=sflag, size = 0x4, scoped, tag = 'scoped memory for tpu_custom_call.1']
    #allocation8 [shape = 'u8[512]{0}', space=smem, size = 0x200, scoped, tag = 'output window, operand 0, single buffered']
    %7 = vsyncpa [#allocation4], 0
    %8 = vsyncpa [#allocation7], 0
    %9 = vsyncpa [#allocation5], 0
    // Predicated region
    $region2: #{tpu_custom_call.1} parent=1 // pred_check
      _
    $region3: #{tpu_custom_call.1} parent=1 // pred_check_branch
      %11 = sbr.rel (0) target = $region5
    $region4: #{tpu_custom_call.1} parent=1 // pred_region
      %s13 = ssub.s32 256, 256
      %14 = vsyncadd [#allocation4], %s13
      %s15 = sshll.u32 [#allocation3], 4
      %s16 = int_to_ptr.vmem [resolvable:$true] %s15
      %21 = dma.hbm_to_vmem [thread:$0]  %s0, 256, %s16, [#allocation4], 128, 128, 8
    $region5: #{tpu_custom_call.1} parent=1 // pred_fallthru
      _
    // Predicated region
    $region6: #{tpu_custom_call.1} parent=1 // pred_check
      _
    $region7: #{tpu_custom_call.1} parent=1 // pred_check_branch
      %23 = sbr.rel (0) target = $region9
    $region8: #{tpu_custom_call.1} parent=1 // pred_region
      %s25 = ssub.s32 256, 256
      %26 = vsyncadd [#allocation7], %s25
      %s27 = sshll.u32 [#allocation6], 4
      %s28 = int_to_ptr.vmem [resolvable:$true] %s27
      %33 = dma.hbm_to_vmem [thread:$0]  %s1, 256, %s28, [#allocation7], 128, 128, 8
    $region9: #{tpu_custom_call.1} parent=1 // pred_fallthru
      _
    // Predicated region
    $region10: #{tpu_custom_call.1} parent=1 // pred_check
      _
    $region11: #{tpu_custom_call.1} parent=1 // pred_check_branch
      %35 = sbr.rel (0) target = $region13
    $region12: #{tpu_custom_call.1} parent=1 // pred_region
      %36 = dma.done [#allocation4], 256
    $region13: #{tpu_custom_call.1} parent=1 // pred_fallthru
      _
    // Predicated region
    $region14: #{tpu_custom_call.1} parent=1 // pred_check
      _
    $region15: #{tpu_custom_call.1} parent=1 // pred_check_branch
      %38 = sbr.rel (0) target = $region17
    $region16: #{tpu_custom_call.1} parent=1 // pred_region
      %39 = dma.done [#allocation7], 256
    $region17: #{tpu_custom_call.1} parent=1 // pred_fallthru
      _
    %p40 = scmp.eq.s32.totalorder 0, 0
    // Predicated region
    $region18: #{tpu_custom_call.1} parent=1 // pred_check
      %p41 = pneg %p40
    $region19: #{tpu_custom_call.1} parent=1 // pred_check_branch
      %43 = sbr.rel (%p41) target = $region21
    $region20: #{tpu_custom_call.1} parent=1 // pred_region
      %44 = vst [vmem:[#allocation2] sm:$0x1] 0.0
    $region21: #{tpu_custom_call.1} parent=1 // pred_fallthru
      _
    %v45 = vld [vmem:[#allocation3] sm:$0xff]
    %v46 = vld [vmem:[#allocation3 + $0x8] sm:$0xff]
    %v47 = vld [vmem:[#allocation6] sm:$0xff]
    %v48 = vld [vmem:[#allocation6 + $0x8] sm:$0xff]
    %v49 = vadd.f32 %v45, 1e-05
    %v50 = vadd.f32 %v46, 1e-05
    %v51 = vlog2.pop %v49
    %v52 = vmul.f32 %v51, 0.6931472
    %v53 = vlog2.pop %v50
    %v54 = vmul.f32 %v53, 0.6931472
    %v55 = vsub.f32 1.0, %v45
    %v56 = vsub.f32 1.0, %v46
    %v57 = vadd.f32 %v55, 1e-05
    %v58 = vadd.f32 %v56, 1e-05
    %v59 = vlog2.pop %v57
    %v60 = vmul.f32 %v59, 0.6931472
    %v61 = vlog2.pop %v58
    %v62 = vmul.f32 %v61, 0.6931472
    %v63 = vmul.f32 %v57, %v57
    %v64 = vmul.f32 %v58, %v58
    %v65 = vmul.f32 %v63, 0.75
    %v66 = vmul.f32 %v64, 0.75
    %v67 = vmul.f32 %v47, %v52
    %v68 = vmul.f32 %v48, %v54
    %v69 = vmul.f32 %v65, %v67
    %v70 = vmul.f32 %v66, %v68
    %v71 = vmul.f32 %v49, %v49
    %v72 = vmul.f32 %v50, %v50
    %v73 = vmul.f32 %v71, 0.25
    %v74 = vmul.f32 %v72, 0.25
    %v75 = vsub.f32 1.0, %v47
    %v76 = vsub.f32 1.0, %v48
    %v77 = vmul.f32 %v75, %v60
    %v78 = vmul.f32 %v76, %v62
    %v79 = vmul.f32 %v73, %v77
    %v80 = vmul.f32 %v74, %v78
    %v81 = vadd.f32 %v69, %v79
    %v82 = vadd.f32 %v70, %v80
    %v83 = vsub.f32 0.0, %v81
    %v84 = vsub.f32 0.0, %v82
    %v85 = vld [vmem:[#allocation2] sm:$0x1]
    %v86 = vadd.f32 %v83, %v84
    %v87 = vrot.slane %v86, 4
    %v88 = vadd.f32 %v86, %v87
    %v89 = vrot.slane %v88, 2
    %v90 = vadd.f32 %v88, %v89
    %v91 = vrot.slane %v90, 1
    %v92 = vadd.f32 %v90, %v91
    %v93 = vadd.f32 %v85, %v92
    %94 = vst [vmem:[#allocation2] sm:$0x1] %v93
    // Predicated region
    $region22: #{tpu_custom_call.1} parent=1 // pred_check
      %p95 = pneg %p40
    $region23: #{tpu_custom_call.1} parent=1 // pred_check_branch
      %97 = sbr.rel (%p95) target = $region25
    $region24: #{tpu_custom_call.1} parent=1 // pred_region
      %v98 = vld [vmem:[#allocation2] sm:$0x1]
      %vm99 = vcmask 1040384
      %v100 = vsel %vm99, %v98, 0.0
      %101 = vadd.xlane.f32.xlu0 %v100
      %v102 = vpop.xlane.xlu0 %101
      %v103 = vrot.slane %v102, 4
      %v104 = vadd.f32 %v102, %v103
      %v105 = vrot.slane %v104, 2
      %v106 = vadd.f32 %v104, %v105
      %v107 = vrot.slane %v106, 1
      %v108 = vadd.f32 %v106, %v107
      %s109 = vtos %v108
      %v110 = vrcp.pop 2048.0
      %s111 = vtos %v110
      %s112 = smul.f32 %s109, %s111
      %s113 = scalar_lea.smem [#allocation8], 0
      %114 = sst [smem:[%s113]] %s112
    $region25: #{tpu_custom_call.1} parent=1 // pred_fallthru
      _
    // Predicated region
    $region26: #{tpu_custom_call.1} parent=1 // pred_check
      _
    $region27: #{tpu_custom_call.1} parent=1 // pred_check_branch
      %116 = sbr.rel (0) target = $region29
    $region28: #{tpu_custom_call.1} parent=1 // pred_region
      %s118 = ssub.s32 16, 16
      %119 = vsyncadd [#allocation5], %s118
      %122 = dma.smem_to_hbm [#allocation8], 16, %s2, [#allocation5]
    $region29: #{tpu_custom_call.1} parent=1 // pred_fallthru
      _
    // Predicated region
    $region30: #{tpu_custom_call.1} parent=1 // pred_check
      _
    $region31: #{tpu_custom_call.1} parent=1 // pred_check_branch
      %124 = sbr.rel (0) target = $region33
    $region32: #{tpu_custom_call.1} parent=1 // pred_region
      %125 = dma.done [#allocation5], 16
    $region33: #{tpu_custom_call.1} parent=1 // pred_fallthru
      _
    %126 = sfence
    %127 = vsyncpa [#allocation4], 1
    %128 = vsyncpa [#allocation7], 1
    %129 = vsyncpa [#allocation5], 1

</llo_original>
